<compile_context>
chip_gen: v7x
topology: tpu7x:2x2x1
jax: 0.10.0
libtpu: 0.0.40
codegen_flags: <defaults>
</compile_context>

<pallas_src>
import jax
import jax.numpy as jnp
from jax.experimental import pallas as pl
from jax.experimental.pallas import tpu as pltpu


def _predictor_kernel(ids_ref, x_ref, wa_ref, ws_ref, ea_ref, es_ref,
                      area_ref, shot_ref):
    # ids_ref : (TN, 1)  int32   target player id per row
    # x_ref   : (TN, D)  f32     decode_output rows (flattened B*S)
    # wa_ref  : (D, A)   bf16    area projection, pre-transposed
    # ws_ref  : (D, C)   bf16    shot projection, pre-transposed
    # ea_ref  : (P, A)   bf16    emb_table @ W_area^T  (per-player area bias)
    # es_ref  : (P, C)   bf16    emb_table @ W_shot^T  (per-player shot bias)
    # area_ref: (TN, A), shot_ref: (TN, C)
    ids = ids_ref[...]
    tn = ids.shape[0]
    p = ea_ref.shape[0]

    # In-kernel bf16 cast (VPU has plenty of slack; avoids a wrapper-side
    # convert pass over x in HBM).
    x_bf = x_ref[...].astype(jnp.bfloat16)                         # (TN, D)

    # One-hot gather of the folded embedding bias, bf16 on the MXU.
    player_iota = jax.lax.broadcasted_iota(jnp.int32, (tn, p), 1)
    one_hot = (player_iota == ids).astype(jnp.bfloat16)            # (TN, P)

    area = jnp.dot(x_bf, wa_ref[...], preferred_element_type=jnp.float32)
    area = area + jnp.dot(one_hot, ea_ref[...],
                          preferred_element_type=jnp.float32)
    shot = jnp.dot(x_bf, ws_ref[...], preferred_element_type=jnp.float32)
    shot = shot + jnp.dot(one_hot, es_ref[...],
                          preferred_element_type=jnp.float32)

    area_ref[...] = area.astype(area_ref.dtype)
    shot_ref[...] = shot.astype(shot_ref.dtype)


def _ceil_to(n, m):
    return -(-n // m) * m


def _vmem_estimate_bytes(tn, d, a, c, p):
    """Approximate lane-padded VMEM footprint for one row tile."""
    lane = 128

    def lanes(n):
        return _ceil_to(n, lane)

    # Row-tiled operands/results (double-buffered by the pipeline).
    ids_b = tn * lanes(1) * 4            # int32; lane padding is the hidden cost
    x_b = tn * lanes(d) * 4              # f32 input (cast happens in-kernel)
    area_b = tn * lanes(a) * 4
    shot_b = tn * lanes(c) * 4
    tiled = 2 * (ids_b + x_b + area_b + shot_b)
    # Resident bf16 weights (constant index_map; tiny, x2 for default buffering).
    w_b = 2 * 2 * (_ceil_to(d, 16) * (lanes(a) + lanes(c))
                   + _ceil_to(p, 16) * (lanes(a) + lanes(c)))
    # In-kernel temporaries: bf16 x copy, bf16 one-hot, f32 accumulators.
    tmp = (tn * lanes(d) * 2 + tn * lanes(p) * 2
           + tn * (lanes(a) + lanes(c)) * 4)
    return tiled + w_b + tmp


def predictor_layer(decode_output, target_player, emb_table, w_area, w_shot,
                    *, block_rows=8192, out_dtype=jnp.float32):
    """decode_output: (B, S, D); target_player: (B, S) int;
    emb_table (P, D), w_area (A, D), w_shot (C, D) in PyTorch Linear layout."""
    B, S, D = decode_output.shape
    N = B * S
    A = w_area.shape[0]
    C = w_shot.shape[0]
    P = emb_table.shape[0]

    # Pre-transposed projections (bf16 MXU operands).
    wa_t = jnp.transpose(w_area).astype(jnp.float32)               # (D, A)
    ws_t = jnp.transpose(w_shot).astype(jnp.float32)               # (D, C)
    wa_bf = wa_t.astype(jnp.bfloat16)
    ws_bf = ws_t.astype(jnp.bfloat16)

    # Fold the embedding table through each projection (tiny f32 GEMMs, then
    # bf16 for the MXU).  Exact up to bf16 rounding of the folded table.
    emb_f32 = emb_table.astype(jnp.float32)
    ea_bf = jnp.dot(emb_f32, wa_t).astype(jnp.bfloat16)            # (P, A)
    es_bf = jnp.dot(emb_f32, ws_t).astype(jnp.bfloat16)            # (P, C)

    # No dtype conversion here: x goes to the kernel as-is, cast on the VPU.
    x_flat = decode_output.reshape(N, D)
    ids_flat = target_player.reshape(N, 1).astype(jnp.int32)

    # Chip-aware VMEM budget (v5e/v6e: 128 MiB physical -> ~48 MiB budget;
    # v7x: 64 MiB per TensorCore -> ~24 MiB budget).
    try:
        vmem_cap = int(pltpu.get_tpu_info().vmem_capacity_bytes)
    except Exception:
        vmem_cap = 64 << 20                                        # conservative
    budget = max(24 << 20, (vmem_cap * 3) // 8)

    # Row tile: big enough to amortize the ~0.35 us per-step pipeline overhead,
    # small enough for the budget, capped near N/2 so grid_n >= 2 (keeps both
    # TensorCores busy on megacore parts).
    tn = min(block_rows, N)
    if N >= 16:
        tn = min(tn, _ceil_to(pl.cdiv(N, 2), 8))
        tn = max(8, (tn // 8) * 8)
        while tn > 512 and _vmem_estimate_bytes(tn, D, A, C, P) > budget:
            tn = max(512, ((tn // 2) // 8) * 8)
    grid_n = pl.cdiv(N, tn)

    est = _vmem_estimate_bytes(tn, D, A, C, P)
    vmem_limit = int(min(max(2 * est + (8 << 20), 32 << 20),
                         (vmem_cap * 3) // 4))

    area_flat, shot_flat = pl.pallas_call(
        _predictor_kernel,
        out_shape=(
            jax.ShapeDtypeStruct((N, A), out_dtype),
            jax.ShapeDtypeStruct((N, C), out_dtype),
        ),
        grid_spec=pltpu.PrefetchScalarGridSpec(
            num_scalar_prefetch=0,
            grid=(grid_n,),
            in_specs=[
                pl.BlockSpec((tn, 1), lambda i: (i, 0)),   # ids      (row tile)
                pl.BlockSpec((tn, D), lambda i: (i, 0)),   # x        (row tile)
                pl.BlockSpec((D, A), lambda i: (0, 0)),    # W_area^T (resident)
                pl.BlockSpec((D, C), lambda i: (0, 0)),    # W_shot^T (resident)
                pl.BlockSpec((P, A), lambda i: (0, 0)),    # emb_proj_area
                pl.BlockSpec((P, C), lambda i: (0, 0)),    # emb_proj_shot
            ],
            out_specs=(
                pl.BlockSpec((tn, A), lambda i: (i, 0)),
                pl.BlockSpec((tn, C), lambda i: (i, 0)),
            ),
        ),
        compiler_params=pltpu.CompilerParams(
            dimension_semantics=("parallel",),
            vmem_limit_bytes=vmem_limit,
        ),
    )(ids_flat, x_flat, wa_bf, ws_bf, ea_bf, es_bf)

    area_logits = area_flat.reshape(B, S, A)
    shot_logits = shot_flat.reshape(B, S, C)
    return area_logits, shot_logits


if __name__ == "__main__":
    # Small config consistent with the module (player_dim == encode_dim).
    config = dict(encode_dim=32, area_num=16, shot_num=12,
                  player_num=8, player_dim=32)
    B, S = 2, 8
    D = config["encode_dim"]
    A = config["area_num"]
    C = config["shot_num"]
    P = config["player_num"]

    key = jax.random.PRNGKey(0)
    k1, k2, k3, k4, k5 = jax.random.split(key, 5)

    decode_output = jax.random.normal(k1, (B, S, D), dtype=jnp.float32)
    target_player = jax.random.randint(k2, (B, S), 0, P, dtype=jnp.int32)

    # Deterministic synthetic parameters (nn.Embedding(padding_idx=0) zeroes
    # row 0 at init; mirror that here).
    emb_table = jax.random.normal(k3, (P, D), dtype=jnp.float32)
    emb_table = emb_table.at[0].set(0.0)
    w_area = jax.random.normal(k4, (A, D), dtype=jnp.float32) * 0.1
    w_shot = jax.random.normal(k5, (C, D), dtype=jnp.float32) * 0.1

    area_logits, shot_logits = predictor_layer(
        decode_output, target_player, emb_table, w_area, w_shot)
    jax.block_until_ready((area_logits, shot_logits))

    # Pure-JAX f32 reference.
    emb_g = emb_table[target_player]                    # (B, S, D)
    x_ref = decode_output + emb_g
    area_ref = jnp.einsum("bsd,ad->bsa", x_ref, w_area)
    shot_ref = jnp.einsum("bsd,cd->bsc", x_ref, w_shot)

    # bf16 MXU operands (f32 accumulation) -> ~1e-3 level error at D=32.
    assert area_logits.shape == (B, S, A) and shot_logits.shape == (B, S, C)
    assert jnp.allclose(area_logits, area_ref, atol=2e-2, rtol=2e-2)
    assert jnp.allclose(shot_logits, shot_ref, atol=2e-2, rtol=2e-2)

    print("KERNEL_OK")
</pallas_src>

<mosaic_0001>
module attributes {stable_mosaic.version = 11 : i64} {
  func.func @_predictor_kernel(%arg0: i32, %arg1: memref<8x1xi32, #tpu.memory_space<vmem>>, %arg2: memref<8x32xf32, #tpu.memory_space<vmem>>, %arg3: memref<32x16xbf16, #tpu.memory_space<vmem>>, %arg4: memref<32x12xbf16, #tpu.memory_space<vmem>>, %arg5: memref<8x16xbf16, #tpu.memory_space<vmem>>, %arg6: memref<8x12xbf16, #tpu.memory_space<vmem>>, %arg7: memref<8x16xf32, #tpu.memory_space<vmem>>, %arg8: memref<8x12xf32, #tpu.memory_space<vmem>>) attributes {dimension_semantics = [#tpu.dimension_semantics<parallel>], iteration_bounds = array<i64: 2>, scalar_prefetch = 0 : i64, scratch_operands = 0 : i64, tpu.core_type = #tpu.core_type<tc>, window_params = [{transform_indices = @transform_0, window_bounds = array<i64: 8, 1>}, {transform_indices = @transform_1, window_bounds = array<i64: 8, 32>}, {pipeline_mode = #tpu.pipeline_mode<synchronous>, transform_indices = @transform_2, window_bounds = array<i64: 32, 16>}, {pipeline_mode = #tpu.pipeline_mode<synchronous>, transform_indices = @transform_3, window_bounds = array<i64: 32, 12>}, {pipeline_mode = #tpu.pipeline_mode<synchronous>, transform_indices = @transform_4, window_bounds = array<i64: 8, 16>}, {pipeline_mode = #tpu.pipeline_mode<synchronous>, transform_indices = @transform_5, window_bounds = array<i64: 8, 12>}, {transform_indices = @transform_6, window_bounds = array<i64: 8, 16>}, {transform_indices = @transform_7, window_bounds = array<i64: 8, 12>}]} {
    %c0 = arith.constant 0 : index
    %c0_0 = arith.constant 0 : index
    %0 = vector.load %arg1[%c0, %c0_0] : memref<8x1xi32, #tpu.memory_space<vmem>>, vector<8x1xi32>
    %c0_1 = arith.constant 0 : index
    %c0_2 = arith.constant 0 : index
    %1 = vector.load %arg2[%c0_1, %c0_2] : memref<8x32xf32, #tpu.memory_space<vmem>>, vector<8x32xf32>
    %2 = arith.truncf %1 : vector<8x32xf32> to vector<8x32xbf16>
    %3 = tpu.iota {dimensions = array<i32: 1>} : vector<8x8xi32>
    %4 = vector.broadcast %0 : vector<8x1xi32> to vector<8x8xi32>
    %5 = arith.cmpi eq, %3, %4 : vector<8x8xi32>
    %6 = arith.extui %5 : vector<8x8xi1> to vector<8x8xi32>
    %7 = arith.sitofp %6 : vector<8x8xi32> to vector<8x8xf32>
    %8 = arith.truncf %7 : vector<8x8xf32> to vector<8x8xbf16>
    %c0_3 = arith.constant 0 : index
    %c0_4 = arith.constant 0 : index
    %9 = vector.load %arg3[%c0_3, %c0_4] : memref<32x16xbf16, #tpu.memory_space<vmem>>, vector<32x16xbf16>
    %cst = arith.constant dense<0.000000e+00> : vector<8x16xf32>
    %10 = tpu.matmul %2, %9, %cst {dimension_numbers = #tpu.dot_dimension_numbers<[1], [0], [0], [1], [0, 0, 1, 1], [], []>} : vector<8x32xbf16>, vector<32x16xbf16>, vector<8x16xf32> -> vector<8x16xf32>
    %c0_5 = arith.constant 0 : index
    %c0_6 = arith.constant 0 : index
    %11 = vector.load %arg5[%c0_5, %c0_6] : memref<8x16xbf16, #tpu.memory_space<vmem>>, vector<8x16xbf16>
    %cst_7 = arith.constant dense<0.000000e+00> : vector<8x16xf32>
    %12 = tpu.matmul %8, %11, %cst_7 {dimension_numbers = #tpu.dot_dimension_numbers<[1], [0], [0], [1], [0, 0, 1, 1], [], []>} : vector<8x8xbf16>, vector<8x16xbf16>, vector<8x16xf32> -> vector<8x16xf32>
    %13 = arith.addf %10, %12 : vector<8x16xf32>
    %c0_8 = arith.constant 0 : index
    %c0_9 = arith.constant 0 : index
    %14 = vector.load %arg4[%c0_8, %c0_9] : memref<32x12xbf16, #tpu.memory_space<vmem>>, vector<32x12xbf16>
    %cst_10 = arith.constant dense<0.000000e+00> : vector<8x12xf32>
    %15 = tpu.matmul %2, %14, %cst_10 {dimension_numbers = #tpu.dot_dimension_numbers<[1], [0], [0], [1], [0, 0, 1, 1], [], []>} : vector<8x32xbf16>, vector<32x12xbf16>, vector<8x12xf32> -> vector<8x12xf32>
    %c0_11 = arith.constant 0 : index
    %c0_12 = arith.constant 0 : index
    %16 = vector.load %arg6[%c0_11, %c0_12] : memref<8x12xbf16, #tpu.memory_space<vmem>>, vector<8x12xbf16>
    %cst_13 = arith.constant dense<0.000000e+00> : vector<8x12xf32>
    %17 = tpu.matmul %8, %16, %cst_13 {dimension_numbers = #tpu.dot_dimension_numbers<[1], [0], [0], [1], [0, 0, 1, 1], [], []>} : vector<8x8xbf16>, vector<8x12xbf16>, vector<8x12xf32> -> vector<8x12xf32>
    %18 = arith.addf %15, %17 : vector<8x12xf32>
    %c0_14 = arith.constant 0 : index
    %c0_15 = arith.constant 0 : index
    %19 = vector.load %arg7[%c0_14, %c0_15] : memref<8x16xf32, #tpu.memory_space<vmem>>, vector<8x16xf32>
    tpu.vector_store %arg7[%c0_14, %c0_15], %13 {strides = array<i32>} : memref<8x16xf32, #tpu.memory_space<vmem>>, vector<8x16xf32>,
    %c0_16 = arith.constant 0 : index
    %c0_17 = arith.constant 0 : index
    %20 = vector.load %arg8[%c0_16, %c0_17] : memref<8x12xf32, #tpu.memory_space<vmem>>, vector<8x12xf32>
    tpu.vector_store %arg8[%c0_16, %c0_17], %18 {strides = array<i32>} : memref<8x12xf32, #tpu.memory_space<vmem>>, vector<8x12xf32>,
    return
  }
  func.func @transform_0(%arg0: i32) -> (i32, i32) {
    %c0_i32 = arith.constant 0 : i32
    %c0_i32_0 = arith.constant 0 : i32
    return %arg0, %c0_i32 : i32, i32
  }
  func.func @transform_1(%arg0: i32) -> (i32, i32) {
    %c0_i32 = arith.constant 0 : i32
    %c0_i32_0 = arith.constant 0 : i32
    return %arg0, %c0_i32 : i32, i32
  }
  func.func @transform_2(%arg0: i32) -> (i32, i32) {
    %c0_i32 = arith.constant 0 : i32
    %c0_i32_0 = arith.constant 0 : i32
    %c0_i32_1 = arith.constant 0 : i32
    return %c0_i32, %c0_i32_0 : i32, i32
  }
  func.func @transform_3(%arg0: i32) -> (i32, i32) {
    %c0_i32 = arith.constant 0 : i32
    %c0_i32_0 = arith.constant 0 : i32
    %c0_i32_1 = arith.constant 0 : i32
    return %c0_i32, %c0_i32_0 : i32, i32
  }
  func.func @transform_4(%arg0: i32) -> (i32, i32) {
    %c0_i32 = arith.constant 0 : i32
    %c0_i32_0 = arith.constant 0 : i32
    %c0_i32_1 = arith.constant 0 : i32
    return %c0_i32, %c0_i32_0 : i32, i32
  }
  func.func @transform_5(%arg0: i32) -> (i32, i32) {
    %c0_i32 = arith.constant 0 : i32
    %c0_i32_0 = arith.constant 0 : i32
    %c0_i32_1 = arith.constant 0 : i32
    return %c0_i32, %c0_i32_0 : i32, i32
  }
  func.func @transform_6(%arg0: i32) -> (i32, i32) {
    %c0_i32 = arith.constant 0 : i32
    %c0_i32_0 = arith.constant 0 : i32
    return %arg0, %c0_i32 : i32, i32
  }
  func.func @transform_7(%arg0: i32) -> (i32, i32) {
    %c0_i32 = arith.constant 0 : i32
    %c0_i32_0 = arith.constant 0 : i32
    return %arg0, %c0_i32 : i32, i32
  }
}

</mosaic_0001>

<llo_original>
// kernel: tpu_custom_call.1
$region0: #{tpu_custom_call.1}
  #allocation0 [shape = 'u32[]', space=smem, size = 0x4, offset = 0x4, fixed_abs, tag = 'smem constant byte address 0x4 - core index']
  #allocation1 [shape = 'u32[144,128]{1,0:T(1,128)}', space=vmem, size = 0x12000, scoped, tag = 'internal scratch']
  %s0 = inlined_call_operand.vmem [shape: s32[16,1], index: 0, kind: input, shape index: {}]
  %s1 = inlined_call_operand.vmem [shape: f32[16,32], index: 1, kind: input, shape index: {}]
  %s2 = inlined_call_operand.vmem [shape: bf16[32,16], index: 2, kind: input, shape index: {}]
  %s3 = inlined_call_operand.vmem [shape: bf16[32,12], index: 3, kind: input, shape index: {}]
  %s4 = inlined_call_operand.vmem [shape: bf16[8,16], index: 4, kind: input, shape index: {}]
  %s5 = inlined_call_operand.vmem [shape: bf16[8,12], index: 5, kind: input, shape index: {}]
  %s6 = inlined_call_operand.hbm [shape: f32[16,16], index: 6, kind: output, shape index: {0}]
  %s7 = inlined_call_operand.hbm [shape: f32[16,12], index: 7, kind: output, shape index: {1}]
  %8 = xla_tuple %s6, %s7
  %s9 = sld [smem:[#allocation0]]
  $region65: #{tpu_custom_call.1} parent=0
    _
  %s11 = ssub.s32 1, %s9
  %s12 = scalar_select 0, %s11, %s9
  $region1: #{tpu_custom_call.1} parent=0
    #allocation2 [shape = 'u8[8192]{0}', space=vmem, size = 0x2000, scoped, tag = 'output window, operand 0']
    #allocation3 [shape = 's32[2]{0}', space=sflag, size = 0x8, scoped, tag = 'scoped memory for tpu_custom_call.1']
    #allocation4 [shape = 'u8[8192]{0}', space=vmem, size = 0x2000, scoped, tag = 'output window, operand 1']
    #allocation5 [shape = 's32[2]{0}', space=sflag, size = 0x8, scoped, tag = 'scoped memory for tpu_custom_call.1']
    %13 = vsyncpa [#allocation3], 0
    %s14 = scalar_lea.sflag [#allocation3], 1
    %15 = vsyncpa %s14, 0
    %16 = vsyncpa [#allocation5], 0
    %s17 = scalar_lea.sflag [#allocation5], 1
    %18 = vsyncpa %s17, 0
    loop: start=0, step=1, limit=4
    $region2: #{tpu_custom_call.1} parent=1 // loop_pre_header
      _
    $region3: #{tpu_custom_call.1} parent=1 // loop_header
      %s20 = sphi 0, %s24
      %p21 = scmp.ge.s32.totalorder %s20, 4
      %s30 = sphi 0, %s32
      %s33 = sphi 0, %s30
      %s34 = sphi 0, %s33
      %s50 = sphi 0, %s34
      %s56 = sphi 0, %s58
      %s59 = sphi 0, %s56
      %s60 = sphi 0, %s59
      %s76 = sphi 0, %s60
      %s80 = sphi 0, %s80
      %s82 = sphi 0, %s80
      %s83 = sphi 0, %s82
      %s97 = sphi 0, %s83
      %s101 = sphi 0, %s101
      %s103 = sphi 0, %s101
      %s104 = sphi 0, %s103
      %s118 = sphi 0, %s104
      %s122 = sphi 0, %s122
      %s124 = sphi 0, %s122
      %s125 = sphi 0, %s124
      %s139 = sphi 0, %s125
      %s143 = sphi 0, %s143
      %s145 = sphi 0, %s143
      %s146 = sphi 0, %s145
      %s160 = sphi 0, %s146
      %s166 = sphi 0, %s168
      %s169 = sphi 0, %s166
      %s170 = sphi 0, %s169
      %s186 = sphi 0, %s170
      %s192 = sphi 0, %s194
      %s195 = sphi 0, %s192
      %s196 = sphi 0, %s195
      %s212 = sphi 0, %s196
    $region4: #{tpu_custom_call.1} parent=1 // loop_header_branch
      %23 = sbr.rel (%p21) target = $region8
    $region5: #{tpu_custom_call.1} parent=1 // loop_body
      %s25 = ssub.s32 %s20, 1
      %s26 = ssub.s32 %s20, 2
      %s27 = sadd.s32 %s20, 1
      %s28 = ssub.s32 %s20, %s27
      %p29 = scmp.eq.s32.totalorder %s28, 0
      %s31 = sadd.s32 %s30, 1
      %s32 = scalar_select %p29, %s30, %s31
      %p35 = pneg %p29
      %p36 = scmp.eq.s32.totalorder %s20, 1
      %p37 = por %p35, %p36
      %p38 = scmp.ne.s32.totalorder %s30, %s33
      %p39 = scmp.eq.s32.totalorder %s20, 0
      %p40 = por %p38, %p39
      %p41 = scmp.ne.s32.totalorder %s30, %s33
      %p42 = scmp.eq.s32.totalorder %s25, 1
      %p43 = por %p41, %p42
      %p44 = scmp.ne.s32.totalorder %s33, %s34
      %p45 = scmp.eq.s32.totalorder %s25, 0
      %p46 = por %p44, %p45
      %p47 = scmp.ne.s32.totalorder %s33, %s34
      %p48 = scmp.eq.s32.totalorder %s26, 1
      %p49 = por %p47, %p48
      %p51 = scmp.ne.s32.totalorder %s34, %s50
      %p52 = scmp.eq.s32.totalorder %s26, 0
      %p53 = por %p51, %p52
      %s54 = ssub.s32 %s20, %s27
      %p55 = scmp.eq.s32.totalorder %s54, 0
      %s57 = sadd.s32 %s56, 1
      %s58 = scalar_select %p55, %s56, %s57
      %p61 = pneg %p55
      %p62 = scmp.eq.s32.totalorder %s20, 1
      %p63 = por %p61, %p62
      %p64 = scmp.ne.s32.totalorder %s56, %s59
      %p65 = scmp.eq.s32.totalorder %s20, 0
      %p66 = por %p64, %p65
      %p67 = scmp.ne.s32.totalorder %s56, %s59
      %p68 = scmp.eq.s32.totalorder %s25, 1
      %p69 = por %p67, %p68
      %p70 = scmp.ne.s32.totalorder %s59, %s60
      %p71 = scmp.eq.s32.totalorder %s25, 0
      %p72 = por %p70, %p71
      %p73 = scmp.ne.s32.totalorder %s59, %s60
      %p74 = scmp.eq.s32.totalorder %s26, 1
      %p75 = por %p73, %p74
      %p77 = scmp.ne.s32.totalorder %s60, %s76
      %p78 = scmp.eq.s32.totalorder %s26, 0
      %p79 = por %p77, %p78
      %s81 = sadd.s32 %s80, 1
      %p84 = scmp.eq.s32.totalorder %s20, 1
      %p85 = scmp.ne.s32.totalorder %s80, %s82
      %p86 = scmp.eq.s32.totalorder %s20, 0
      %p87 = por %p85, %p86
      %p88 = scmp.ne.s32.totalorder %s80, %s82
      %p89 = scmp.eq.s32.totalorder %s25, 1
      %p90 = por %p88, %p89
      %p91 = scmp.ne.s32.totalorder %s82, %s83
      %p92 = scmp.eq.s32.totalorder %s25, 0
      %p93 = por %p91, %p92
      %p94 = scmp.ne.s32.totalorder %s82, %s83
      %p95 = scmp.eq.s32.totalorder %s26, 1
      %p96 = por %p94, %p95
      %p98 = scmp.ne.s32.totalorder %s83, %s97
      %p99 = scmp.eq.s32.totalorder %s26, 0
      %p100 = por %p98, %p99
      %s102 = sadd.s32 %s101, 1
      %p105 = scmp.eq.s32.totalorder %s20, 1
      %p106 = scmp.ne.s32.totalorder %s101, %s103
      %p107 = scmp.eq.s32.totalorder %s20, 0
      %p108 = por %p106, %p107
      %p109 = scmp.ne.s32.totalorder %s101, %s103
      %p110 = scmp.eq.s32.totalorder %s25, 1
      %p111 = por %p109, %p110
      %p112 = scmp.ne.s32.totalorder %s103, %s104
      %p113 = scmp.eq.s32.totalorder %s25, 0
      %p114 = por %p112, %p113
      %p115 = scmp.ne.s32.totalorder %s103, %s104
      %p116 = scmp.eq.s32.totalorder %s26, 1
      %p117 = por %p115, %p116
      %p119 = scmp.ne.s32.totalorder %s104, %s118
      %p120 = scmp.eq.s32.totalorder %s26, 0
      %p121 = por %p119, %p120
      %s123 = sadd.s32 %s122, 1
      %p126 = scmp.eq.s32.totalorder %s20, 1
      %p127 = scmp.ne.s32.totalorder %s122, %s124
      %p128 = scmp.eq.s32.totalorder %s20, 0
      %p129 = por %p127, %p128
      %p130 = scmp.ne.s32.totalorder %s122, %s124
      %p131 = scmp.eq.s32.totalorder %s25, 1
      %p132 = por %p130, %p131
      %p133 = scmp.ne.s32.totalorder %s124, %s125
      %p134 = scmp.eq.s32.totalorder %s25, 0
      %p135 = por %p133, %p134
      %p136 = scmp.ne.s32.totalorder %s124, %s125
      %p137 = scmp.eq.s32.totalorder %s26, 1
      %p138 = por %p136, %p137
      %p140 = scmp.ne.s32.totalorder %s125, %s139
      %p141 = scmp.eq.s32.totalorder %s26, 0
      %p142 = por %p140, %p141
      %s144 = sadd.s32 %s143, 1
      %p147 = scmp.eq.s32.totalorder %s20, 1
      %p148 = scmp.ne.s32.totalorder %s143, %s145
      %p149 = scmp.eq.s32.totalorder %s20, 0
      %p150 = por %p148, %p149
      %p151 = scmp.ne.s32.totalorder %s143, %s145
      %p152 = scmp.eq.s32.totalorder %s25, 1
      %p153 = por %p151, %p152
      %p154 = scmp.ne.s32.totalorder %s145, %s146
      %p155 = scmp.eq.s32.totalorder %s25, 0
      %p156 = por %p154, %p155
      %p157 = scmp.ne.s32.totalorder %s145, %s146
      %p158 = scmp.eq.s32.totalorder %s26, 1
      %p159 = por %p157, %p158
      %p161 = scmp.ne.s32.totalorder %s146, %s160
      %p162 = scmp.eq.s32.totalorder %s26, 0
      %p163 = por %p161, %p162
      %s164 = ssub.s32 %s20, %s27
      %p165 = scmp.eq.s32.totalorder %s164, 0
      %s167 = sadd.s32 %s166, 1
      %s168 = scalar_select %p165, %s166, %s167
      %p171 = pneg %p165
      %p172 = scmp.eq.s32.totalorder %s20, 1
      %p173 = por %p171, %p172
      %p174 = scmp.ne.s32.totalorder %s166, %s169
      %p175 = scmp.eq.s32.totalorder %s20, 0
      %p176 = por %p174, %p175
      %p177 = scmp.ne.s32.totalorder %s166, %s169
      %p178 = scmp.eq.s32.totalorder %s25, 1
      %p179 = por %p177, %p178
      %p180 = scmp.ne.s32.totalorder %s169, %s170
      %p181 = scmp.eq.s32.totalorder %s25, 0
      %p182 = por %p180, %p181
      %p183 = scmp.ne.s32.totalorder %s169, %s170
      %p184 = scmp.eq.s32.totalorder %s26, 1
      %p185 = por %p183, %p184
      %p187 = scmp.ne.s32.totalorder %s170, %s186
      %p188 = scmp.eq.s32.totalorder %s26, 0
      %p189 = por %p187, %p188
      %s190 = ssub.s32 %s20, %s27
      %p191 = scmp.eq.s32.totalorder %s190, 0
      %s193 = sadd.s32 %s192, 1
      %s194 = scalar_select %p191, %s192, %s193
      %p197 = pneg %p191
      %p198 = scmp.eq.s32.totalorder %s20, 1
      %p199 = por %p197, %p198
      %p200 = scmp.ne.s32.totalorder %s192, %s195
      %p201 = scmp.eq.s32.totalorder %s20, 0
      %p202 = por %p200, %p201
      %p203 = scmp.ne.s32.totalorder %s192, %s195
      %p204 = scmp.eq.s32.totalorder %s25, 1
      %p205 = por %p203, %p204
      %p206 = scmp.ne.s32.totalorder %s195, %s196
      %p207 = scmp.eq.s32.totalorder %s25, 0
      %p208 = por %p206, %p207
      %p209 = scmp.ne.s32.totalorder %s195, %s196
      %p210 = scmp.eq.s32.totalorder %s26, 1
      %p211 = por %p209, %p210
      %p213 = scmp.ne.s32.totalorder %s196, %s212
      %p214 = scmp.eq.s32.totalorder %s26, 0
      %p215 = por %p213, %p214
      %p216 = scmp.le.s32.totalorder 1, %s20
      %p217 = scmp.lt.s32.totalorder %s20, 3
      %p218 = pnand %p216, %p217
      %p219 = pneg %p218
      // Predicated region
      $region9: #{tpu_custom_call.1} parent=5 // pred_check
        _
      $region10: #{tpu_custom_call.1} parent=5 // pred_check_branch
        %221 = sbr.rel (%p218) target = $region12
      $region11: #{tpu_custom_call.1} parent=5 // pred_region
        %s222 = ssub.s32 %s20, 1
        // Predicated region
        $region13: #{tpu_custom_call.1} parent=11 // pred_check
          %p223 = pneg %p93
        $region14: #{tpu_custom_call.1} parent=11 // pred_check_branch
          %225 = sbr.rel (%p223) target = $region16
        $region15: #{tpu_custom_call.1} parent=11 // pred_region
          _
        $region16: #{tpu_custom_call.1} parent=11 // pred_fallthru
          _
        // Predicated region
        $region17: #{tpu_custom_call.1} parent=11 // pred_check
          %p226 = pneg %p114
        $region18: #{tpu_custom_call.1} parent=11 // pred_check_branch
          %228 = sbr.rel (%p226) target = $region20
        $region19: #{tpu_custom_call.1} parent=11 // pred_region
          _
        $region20: #{tpu_custom_call.1} parent=11 // pred_fallthru
          _
        // Predicated region
        $region21: #{tpu_custom_call.1} parent=11 // pred_check
          %p229 = pneg %p135
        $region22: #{tpu_custom_call.1} parent=11 // pred_check_branch
          %231 = sbr.rel (%p229) target = $region24
        $region23: #{tpu_custom_call.1} parent=11 // pred_region
          _
        $region24: #{tpu_custom_call.1} parent=11 // pred_fallthru
          _
        // Predicated region
        $region25: #{tpu_custom_call.1} parent=11 // pred_check
          %p232 = pneg %p156
        $region26: #{tpu_custom_call.1} parent=11 // pred_check_branch
          %234 = sbr.rel (%p232) target = $region28
        $region27: #{tpu_custom_call.1} parent=11 // pred_region
          _
        $region28: #{tpu_custom_call.1} parent=11 // pred_fallthru
          _
      $region12: #{tpu_custom_call.1} parent=5 // pred_fallthru
        _
      %p235 = scmp.lt.s32.totalorder %s20, 2
      // Predicated region
      $region29: #{tpu_custom_call.1} parent=5 // pred_check
        %p236 = pneg %p235
      $region30: #{tpu_custom_call.1} parent=5 // pred_check_branch
        %238 = sbr.rel (%p236) target = $region32
      $region31: #{tpu_custom_call.1} parent=5 // pred_region
        // Predicated region
        $region33: #{tpu_custom_call.1} parent=31 // pred_check
          %p239 = pneg %p40
        $region34: #{tpu_custom_call.1} parent=31 // pred_check_branch
          %241 = sbr.rel (%p239) target = $region36
        $region35: #{tpu_custom_call.1} parent=31 // pred_region
          %p242 = scmp.lt.s32.totalorder %s20, 1
          %s243 = scalar_select %p242, %s20, 1
          %s244 = smul.addr %s243, 8
          %s245 = scalar_lea.vmem %s0, %s244
        $region36: #{tpu_custom_call.1} parent=31 // pred_fallthru
          _
        // Predicated region
        $region37: #{tpu_custom_call.1} parent=31 // pred_check
          %p246 = pneg %p66
        $region38: #{tpu_custom_call.1} parent=31 // pred_check_branch
          %248 = sbr.rel (%p246) target = $region40
        $region39: #{tpu_custom_call.1} parent=31 // pred_region
          %p249 = scmp.lt.s32.totalorder %s20, 1
          %s250 = scalar_select %p249, %s20, 1
          %s251 = smul.addr %s250, 8
          %s252 = scalar_lea.vmem %s1, %s251
        $region40: #{tpu_custom_call.1} parent=31 // pred_fallthru
          _
      $region32: #{tpu_custom_call.1} parent=5 // pred_fallthru
        _
      %p253 = scmp.le.s32.totalorder 1, %s20
      %p254 = scmp.lt.s32.totalorder %s20, 3
      %p255 = pnand %p253, %p254
      %p256 = pneg %p255
      // Predicated region
      $region41: #{tpu_custom_call.1} parent=5 // pred_check
        _
      $region42: #{tpu_custom_call.1} parent=5 // pred_check_branch
        %258 = sbr.rel (%p255) target = $region44
      $region43: #{tpu_custom_call.1} parent=5 // pred_region
        %s259 = ssub.s32 %s20, 1
        %p260 = scmp.lt.s32.totalorder %s25, 1
        %s261 = scalar_select %p260, %s25, 1
        %s262 = smul.addr %s261, 8
        %s263 = scalar_lea.vmem %s0, %s262
        %p264 = pneg %p46
        %p265 = pneg %p43
        %p266 = scmp.lt.s32.totalorder %s25, 1
        %s267 = scalar_select %p266, %s25, 1
        %s268 = smul.addr %s267, 8
        %s269 = scalar_lea.vmem %s1, %s268
        %p270 = pneg %p72
        %p271 = pneg %p69
        %p272 = pneg %p93
        %p273 = pneg %p90
        %p274 = pneg %p114
        %p275 = pneg %p111
        %p276 = pneg %p135
        %p277 = pneg %p132
        %p278 = pneg %p156
        %p279 = pneg %p153
        %p280 = pneg %p182
        %p281 = pneg %p179
        %s282 = sand.u32 %s169, 1
        %s283 = scalar_lea.sflag [#allocation3], %s282
        %s284 = sand.u32 %s169, 1
        %s285 = smul.addr %s284, 8
        %s286 = scalar_lea.vmem [#allocation2], %s285
        %p287 = pneg %p208
        %p288 = pneg %p205
        %s289 = sand.u32 %s195, 1
        %s290 = scalar_lea.sflag [#allocation5], %s289
        %s291 = sand.u32 %s195, 1
        %s292 = smul.addr %s291, 8
        %s293 = scalar_lea.vmem [#allocation4], %s292
        %p294 = scmp.lt.s32.totalorder %s25, 1
        %s295 = scalar_select %p294, %s25, 1
        %s296 = smul.addr %s295, 8
        %s297 = scalar_lea.vmem %s0, %s296
        %p298 = scmp.lt.s32.totalorder %s25, 1
        %s299 = scalar_select %p298, %s25, 1
        %s300 = smul.addr %s299, 8
        %s301 = scalar_lea.vmem %s1, %s300
        %v303 = vld [vmem:[%s297] sm:$0xff]
        %v304 = vld [vmem:[%s301] sm:$0xff]
        %v305 = vpack.c.bf16 %v304, %v304
        %v306 = vlaneseq
        %v307 = vand.u32 %v306, 127
        %308 = vset.pattern.permute.xlu0 0
        %309 = vperm.xlu0 %308, %v303
        %v310 = vpop.permute.xlu0 %309
        %vm311 = vcmp.eq.s32.totalorder %v307, %v310
        %v312 = vsel %vm311, 1, 0
        %v313 = vcvt.s32.f32 %v312
        %v314 = vpack.c.bf16 %v313, %v313
        %v315 = vld [vmem:[%s2] sm:$0xf]
        %v316 = vld [vmem:[%s2 + $0x4] sm:$0xf]
        %v317 = vld [vmem:[%s2 + $0x8] sm:$0xf]
        %v318 = vld [vmem:[%s2 + $0xc] sm:$0xf]
        %v319 = vld [vmem:[%s4] sm:$0xf]
        %vm320 = vcmask 64512
        %v322 = vsel %vm320, %v314, 0
        %vm324 = vcmask 1043456
        %v326 = vsel %vm324, %v319, 0
        %328 = vmatprep.subr.bf16.mxu0 0
        %329 = vmatpush1.bf16.msra.mxu0 %v326
        %330 = vmatprep.subr.bf16.mxu0 0
        %331 = vmatpush1.bf16.msra.mxu0 0
        %332 = vmatprep.subr.bf16.mxu0 0
        %333 = vmatpush1.bf16.msra.mxu0 0
        %334 = vmatprep.subr.bf16.mxu0 0
        %335 = vmatpush1.bf16.msra.mxu0 0
        %336 = vmatprep.subr.bf16.mxu0 0
        %337 = vmatpush1.bf16.msra.mxu0 0
        %338 = vmatprep.subr.bf16.mxu0 0
        %339 = vmatpush1.bf16.msra.mxu0 0
        %340 = vmatprep.subr.bf16.mxu0 0
        %341 = vmatpush1.bf16.msra.mxu0 0
        %342 = vmatprep.subr.bf16.mxu0 0
        %343 = vmatpush1.bf16.msra.mxu0 0
        %344 = vmatprep.subr.bf16.mxu0 0
        %345 = vmatpush1.bf16.msra.mxu0 0
        %346 = vmatprep.subr.bf16.mxu0 0
        %347 = vmatpush1.bf16.msra.mxu0 0
        %348 = vmatprep.subr.bf16.mxu0 0
        %349 = vmatpush1.bf16.msra.mxu0 0
        %350 = vmatprep.subr.bf16.mxu0 0
        %351 = vmatpush1.bf16.msra.mxu0 0
        %352 = vmatprep.subr.bf16.mxu0 0
        %353 = vmatpush1.bf16.msra.mxu0 0
        %354 = vmatprep.subr.bf16.mxu0 0
        %355 = vmatpush1.bf16.msra.mxu0 0
        %356 = vmatprep.subr.bf16.mxu0 0
        %357 = vmatpush1.bf16.msra.mxu0 0
        %358 = vmatprep.subr.bf16.mxu0 0
        %359 = vmatpush1.bf16.msra.mxu0 0
        %360 = vmatprep.mubr.bf16.mxu0 0
        %361 = vmatmul.mubr.bf16.gmra.mrb[0].mxu0 %v322
        %v362 = vpop.f32.mrb[0].mxu0
        %v363 = vadd.f32 0.0, %v362
        %v364 = vpop.f32.mrb[0].mxu0
        %v365 = vpop.f32.mrb[0].mxu0
        %v366 = vpop.f32.mrb[0].mxu0
        %367 = vdwg.mxu0
        %v372 = vunpack.c.l.b16 %v315
        %v373 = vunpack.c.l.b16 %v316
        %v374 = vunpack.c.l.b16 %v317
        %v375 = vunpack.c.l.b16 %v318
        %v376 = vpack.c.b16 %v373, %v372
        %v377 = vpack.c.b16 %v375, %v374
        %vm380 = vcmask 261120
        %v382 = vsel %vm380, %v305, 0
        %384 = vmatprep.subr.bf16.mxu0 0
        %385 = vmatpush1.bf16.msra.mxu0 %v376
        %386 = vmatprep.subr.bf16.mxu0 0
        %387 = vmatpush1.bf16.msra.mxu0 %v377
        %388 = vmatprep.subr.bf16.mxu0 0
        %389 = vmatpush1.bf16.msra.mxu0 0
        %390 = vmatprep.subr.bf16.mxu0 0
        %391 = vmatpush1.bf16.msra.mxu0 0
        %392 = vmatprep.subr.bf16.mxu0 0
        %393 = vmatpush1.bf16.msra.mxu0 0
        %394 = vmatprep.subr.bf16.mxu0 0
        %395 = vmatpush1.bf16.msra.mxu0 0
        %396 = vmatprep.subr.bf16.mxu0 0
        %397 = vmatpush1.bf16.msra.mxu0 0
        %398 = vmatprep.subr.bf16.mxu0 0
        %399 = vmatpush1.bf16.msra.mxu0 0
        %400 = vmatprep.subr.bf16.mxu0 0
        %401 = vmatpush1.bf16.msra.mxu0 0
        %402 = vmatprep.subr.bf16.mxu0 0
        %403 = vmatpush1.bf16.msra.mxu0 0
        %404 = vmatprep.subr.bf16.mxu0 0
        %405 = vmatpush1.bf16.msra.mxu0 0
        %406 = vmatprep.subr.bf16.mxu0 0
        %407 = vmatpush1.bf16.msra.mxu0 0
        %408 = vmatprep.subr.bf16.mxu0 0
        %409 = vmatpush1.bf16.msra.mxu0 0
        %410 = vmatprep.subr.bf16.mxu0 0
        %411 = vmatpush1.bf16.msra.mxu0 0
        %412 = vmatprep.subr.bf16.mxu0 0
        %413 = vmatpush1.bf16.msra.mxu0 0
        %414 = vmatprep.subr.bf16.mxu0 0
        %415 = vmatpush1.bf16.msra.mxu0 0
        %416 = vmatprep.mubr.bf16.mxu0 0
        %417 = vmatmul.mubr.bf16.gmra.mrb[0].mxu0 %v382
        %v418 = vpop.f32.mrb[0].mxu0
        %v419 = vadd.f32 %v363, %v418
        %v420 = vpop.f32.mrb[0].mxu0
        %v421 = vpop.f32.mrb[0].mxu0
        %v422 = vpop.f32.mrb[0].mxu0
        %423 = vdwg.mxu0
        %v424 = vld [vmem:[%s3] sm:$0xf]
        %v425 = vld [vmem:[%s3 + $0x4] sm:$0xf]
        %v426 = vld [vmem:[%s3 + $0x8] sm:$0xf]
        %v427 = vld [vmem:[%s3 + $0xc] sm:$0xf]
        %v428 = vld [vmem:[%s5] sm:$0xf]
        %v430 = vsel %vm324, %v428, 0
        %432 = vmatprep.subr.bf16.mxu0 0
        %433 = vmatpush1.bf16.msra.mxu0 %v430
        %434 = vmatprep.subr.bf16.mxu0 0
        %435 = vmatpush1.bf16.msra.mxu0 0
        %436 = vmatprep.subr.bf16.mxu0 0
        %437 = vmatpush1.bf16.msra.mxu0 0
        %438 = vmatprep.subr.bf16.mxu0 0
        %439 = vmatpush1.bf16.msra.mxu0 0
        %440 = vmatprep.subr.bf16.mxu0 0
        %441 = vmatpush1.bf16.msra.mxu0 0
        %442 = vmatprep.subr.bf16.mxu0 0
        %443 = vmatpush1.bf16.msra.mxu0 0
        %444 = vmatprep.subr.bf16.mxu0 0
        %445 = vmatpush1.bf16.msra.mxu0 0
        %446 = vmatprep.subr.bf16.mxu0 0
        %447 = vmatpush1.bf16.msra.mxu0 0
        %448 = vmatprep.subr.bf16.mxu0 0
        %449 = vmatpush1.bf16.msra.mxu0 0
        %450 = vmatprep.subr.bf16.mxu0 0
        %451 = vmatpush1.bf16.msra.mxu0 0
        %452 = vmatprep.subr.bf16.mxu0 0
        %453 = vmatpush1.bf16.msra.mxu0 0
        %454 = vmatprep.subr.bf16.mxu0 0
        %455 = vmatpush1.bf16.msra.mxu0 0
        %456 = vmatprep.subr.bf16.mxu0 0
        %457 = vmatpush1.bf16.msra.mxu0 0
        %458 = vmatprep.subr.bf16.mxu0 0
        %459 = vmatpush1.bf16.msra.mxu0 0
        %460 = vmatprep.subr.bf16.mxu0 0
        %461 = vmatpush1.bf16.msra.mxu0 0
        %462 = vmatprep.subr.bf16.mxu0 0
        %463 = vmatpush1.bf16.msra.mxu0 0
        %464 = vmatprep.mubr.bf16.mxu0 0
        %465 = vmatmul.mubr.bf16.gmra.mrb[0].mxu0 %v322
        %v466 = vpop.f32.mrb[0].mxu0
        %v467 = vadd.f32 0.0, %v466
        %v468 = vpop.f32.mrb[0].mxu0
        %v469 = vpop.f32.mrb[0].mxu0
        %v470 = vpop.f32.mrb[0].mxu0
        %471 = vdwg.mxu0
        %v476 = vunpack.c.l.b16 %v424
        %v477 = vunpack.c.l.b16 %v425
        %v478 = vunpack.c.l.b16 %v426
        %v479 = vunpack.c.l.b16 %v427
        %v480 = vpack.c.b16 %v477, %v476
        %v481 = vpack.c.b16 %v479, %v478
        %484 = vmatprep.subr.bf16.mxu0 0
        %485 = vmatpush1.bf16.msra.mxu0 %v480
        %486 = vmatprep.subr.bf16.mxu0 0
        %487 = vmatpush1.bf16.msra.mxu0 %v481
        %488 = vmatprep.subr.bf16.mxu0 0
        %489 = vmatpush1.bf16.msra.mxu0 0
        %490 = vmatprep.subr.bf16.mxu0 0
        %491 = vmatpush1.bf16.msra.mxu0 0
        %492 = vmatprep.subr.bf16.mxu0 0
        %493 = vmatpush1.bf16.msra.mxu0 0
        %494 = vmatprep.subr.bf16.mxu0 0
        %495 = vmatpush1.bf16.msra.mxu0 0
        %496 = vmatprep.subr.bf16.mxu0 0
        %497 = vmatpush1.bf16.msra.mxu0 0
        %498 = vmatprep.subr.bf16.mxu0 0
        %499 = vmatpush1.bf16.msra.mxu0 0
        %500 = vmatprep.subr.bf16.mxu0 0
        %501 = vmatpush1.bf16.msra.mxu0 0
        %502 = vmatprep.subr.bf16.mxu0 0
        %503 = vmatpush1.bf16.msra.mxu0 0
        %504 = vmatprep.subr.bf16.mxu0 0
        %505 = vmatpush1.bf16.msra.mxu0 0
        %506 = vmatprep.subr.bf16.mxu0 0
        %507 = vmatpush1.bf16.msra.mxu0 0
        %508 = vmatprep.subr.bf16.mxu0 0
        %509 = vmatpush1.bf16.msra.mxu0 0
        %510 = vmatprep.subr.bf16.mxu0 0
        %511 = vmatpush1.bf16.msra.mxu0 0
        %512 = vmatprep.subr.bf16.mxu0 0
        %513 = vmatpush1.bf16.msra.mxu0 0
        %514 = vmatprep.subr.bf16.mxu0 0
        %515 = vmatpush1.bf16.msra.mxu0 0
        %516 = vmatprep.mubr.bf16.mxu0 0
        %517 = vmatmul.mubr.bf16.gmra.mrb[0].mxu0 %v382
        %v518 = vpop.f32.mrb[0].mxu0
        %v519 = vadd.f32 %v467, %v518
        %v520 = vpop.f32.mrb[0].mxu0
        %v521 = vpop.f32.mrb[0].mxu0
        %v522 = vpop.f32.mrb[0].mxu0
        %523 = vdwg.mxu0
        %vm524 = vcmask 130048
        %525 = vst.msk [vmem:[%s286] sm:$0xff] %vm524, %v419
        %vm526 = vcmask 97280
        %527 = vst.msk [vmem:[%s293] sm:$0xff] %vm526, %v519
        %s528 = sand.u32 %s169, 1
        %s529 = scalar_lea.sflag [#allocation3], %s528
        %s530 = sand.u32 %s169, 1
        %s531 = smul.addr %s530, 8
        %s532 = scalar_lea.vmem [#allocation2], %s531
        %s533 = sand.u32 %s195, 1
        %s534 = scalar_lea.sflag [#allocation5], %s533
        %s535 = sand.u32 %s195, 1
        %s536 = smul.addr %s535, 8
        %s537 = scalar_lea.vmem [#allocation4], %s536
        // Predicated region
        $region45: #{tpu_custom_call.1} parent=43 // pred_check
          %p538 = pneg %p179
        $region46: #{tpu_custom_call.1} parent=43 // pred_check_branch
          %540 = sbr.rel (%p538) target = $region48
        $region47: #{tpu_custom_call.1} parent=43 // pred_region
          %s542 = ssub.s32 128, 128
          %543 = vsyncadd %s529, %s542
          %s544 = smul.addr %s25, 128
          %s545 = scalar_lea.hbm %s6, %s544
          %s547 = sshll.u32 %s532, 4
          %s548 = int_to_ptr.vmem [resolvable:$true] %s547
          %550 = dma.vmem_to_hbm [thread:$0]  %s548, 128, %s545, %s529
        $region48: #{tpu_custom_call.1} parent=43 // pred_fallthru
          _
        // Predicated region
        $region49: #{tpu_custom_call.1} parent=43 // pred_check
          %p551 = pneg %p205
        $region50: #{tpu_custom_call.1} parent=43 // pred_check_branch
          %553 = sbr.rel (%p551) target = $region52
        $region51: #{tpu_custom_call.1} parent=43 // pred_region
          %s555 = ssub.s32 128, 128
          %556 = vsyncadd %s534, %s555
          %s557 = smul.addr %s25, 128
          %s558 = scalar_lea.hbm %s7, %s557
          %s560 = sshll.u32 %s537, 4
          %s561 = int_to_ptr.vmem [resolvable:$true] %s560
          %563 = dma.vmem_to_hbm [thread:$0]  %s561, 128, %s558, %s534
        $region52: #{tpu_custom_call.1} parent=43 // pred_fallthru
          _
      $region44: #{tpu_custom_call.1} parent=5 // pred_fallthru
        _
      %p564 = scmp.le.s32.totalorder 2, %s20
      // Predicated region
      $region53: #{tpu_custom_call.1} parent=5 // pred_check
        %p565 = pneg %p564
      $region54: #{tpu_custom_call.1} parent=5 // pred_check_branch
        %567 = sbr.rel (%p565) target = $region56
      $region55: #{tpu_custom_call.1} parent=5 // pred_region
        %s568 = ssub.s32 %s20, 2
        // Predicated region
        $region57: #{tpu_custom_call.1} parent=55 // pred_check
          %p569 = pneg %p185
        $region58: #{tpu_custom_call.1} parent=55 // pred_check_branch
          %571 = sbr.rel (%p569) target = $region60
        $region59: #{tpu_custom_call.1} parent=55 // pred_region
          %s572 = sand.u32 %s170, 1
          %s573 = scalar_lea.sflag [#allocation3], %s572
          %s574 = sand.u32 %s170, 1
          %s575 = smul.addr %s574, 8
          %s576 = scalar_lea.vmem [#allocation2], %s575
          %577 = dma.done %s573, 128
        $region60: #{tpu_custom_call.1} parent=55 // pred_fallthru
          _
        // Predicated region
        $region61: #{tpu_custom_call.1} parent=55 // pred_check
          %p578 = pneg %p211
        $region62: #{tpu_custom_call.1} parent=55 // pred_check_branch
          %580 = sbr.rel (%p578) target = $region64
        $region63: #{tpu_custom_call.1} parent=55 // pred_region
          %s581 = sand.u32 %s196, 1
          %s582 = scalar_lea.sflag [#allocation5], %s581
          %s583 = sand.u32 %s196, 1
          %s584 = smul.addr %s583, 8
          %s585 = scalar_lea.vmem [#allocation4], %s584
          %586 = dma.done %s582, 128
        $region64: #{tpu_custom_call.1} parent=55 // pred_fallthru
          _
      $region56: #{tpu_custom_call.1} parent=5 // pred_fallthru
        _
    $region6: #{tpu_custom_call.1} parent=1 // loop_footer
      %s24 = sadd.s32 1, %s20
    $region7: #{tpu_custom_call.1} parent=1 // loop_footer_branch
      %19 = sbr.rel target = $region3
    $region8: #{tpu_custom_call.1} parent=1 // loop_exit
      _
    %587 = vsyncpa [#allocation3], 1
    %s588 = scalar_lea.sflag [#allocation3], 1
    %589 = vsyncpa %s588, 1
    %590 = vsyncpa [#allocation5], 1
    %s591 = scalar_lea.sflag [#allocation5], 1
    %592 = vsyncpa %s591, 1

</llo_original>
